<compile_context>
chip_gen: v7x
topology: tpu7x:2x2x1
jax: 0.10.0
libtpu: 0.0.40
codegen_flags: <defaults>
</compile_context>

<pallas_src>
import functools

import jax
import jax.numpy as jnp
from jax.experimental import pallas as pl
from jax.experimental.pallas import tpu as pltpu


def _round_up(x, m):
    return (x + m - 1) // m * m


def convblock_kernel(x_ref, w_ref, shift_ref, o_ref):
    """Fused K-tap conv (bf16 MXU matmuls) + folded-BN shift + SiLU, one sample.

    x_ref     : (1, C_in, L_out + K - 1) bf16   zero-padded input sample
    w_ref     : (K, C_out, C_in)         bf16   conv taps with BN scale folded in
    shift_ref : (C_out, 1)               f32    folded BN shift
    o_ref     : (1, C_out, L_out)        f32    output sample (lane-dense L_out)
    """
    K = w_ref.shape[0]
    c_out = w_ref.shape[1]
    l_out = o_ref.shape[2]

    acc = jnp.zeros((c_out, l_out), jnp.float32)
    for k in range(K):                       # static unroll over taps
        # Static lane slice of the padded sample: x_pad[:, k : k + L_out].
        x_k = x_ref[0, :, pl.ds(k, l_out)]   # (C_in, L_out) bf16
        acc = acc + jnp.dot(w_ref[k], x_k, preferred_element_type=jnp.float32)

    y = acc + shift_ref[...]                 # folded BatchNorm shift (f32 epilogue)
    o_ref[0] = (y * jax.nn.sigmoid(y)).astype(o_ref.dtype)   # SiLU


@jax.jit
def conv_block(x, weight, gamma, beta, running_mean, running_var, *, eps=1e-5):
    """x: (N, C, L) float32; weight: (C_out, C_in, K) PyTorch Conv1d layout."""
    N, C, L = x.shape
    C_out, C_in, K = weight.shape

    # PyTorch padding='same': left = total//2, right = total - left.
    total_pad = K - 1
    left = total_pad // 2

    # Lane-dense output length (multiple of 128); padded input length.
    L_out = _round_up(L, 128)
    Lp = L_out + K - 1

    # Cast to bf16 BEFORE padding (halves wrapper-pass bytes), then zero-pad:
    # `left` conv pads on the left, conv pad + lane-alignment zeros on the right.
    pad_right = Lp - L - left
    x_pad = jnp.pad(x.astype(jnp.bfloat16),
                    ((0, 0), (0, 0), (left, pad_right)))        # (N, C, Lp) bf16

    # Fold BatchNorm (eval) into the weight: scale -> weight, shift kept separate.
    inv_std = 1.0 / jnp.sqrt(running_var + eps)
    scale = gamma * inv_std                                     # (C_out,)
    shift = (beta - running_mean * scale).reshape(C_out, 1).astype(jnp.float32)

    # Per-tap weight matrices: (C_out, C_in, K) -> (K, C_out, C_in), bf16.
    w_taps = jnp.transpose(weight * scale[:, None, None], (2, 0, 1))
    w_taps = w_taps.astype(jnp.bfloat16)

    # Per-step VMEM footprint (double-buffered in/out blocks + resident weights).
    step_bytes = (2 * C_in * Lp * 2          # x block, bf16, 2 buffers
                  + K * C_out * C_in * 2     # weight taps, bf16
                  + C_out * 4                # shift
                  + 2 * C_out * L_out * 4)   # out block, f32, 2 buffers
    vmem_limit = int(min(max(2 * step_bytes, 32 * 1024 * 1024),
                         48 * 1024 * 1024))  # stay within v7x scoped VMEM

    out = pl.pallas_call(
        convblock_kernel,
        out_shape=jax.ShapeDtypeStruct((N, C_out, L_out), jnp.float32),
        grid_spec=pltpu.PrefetchScalarGridSpec(
            num_scalar_prefetch=0,
            grid=(N,),                                          # one sample per step
            in_specs=[
                pl.BlockSpec((1, C_in, Lp), lambda n: (n, 0, 0)),       # padded x
                pl.BlockSpec((K, C_out, C_in), lambda n: (0, 0, 0)),    # taps
                pl.BlockSpec((C_out, 1), lambda n: (0, 0)),             # BN shift
            ],
            out_specs=pl.BlockSpec((1, C_out, L_out), lambda n: (n, 0, 0)),
        ),
        compiler_params=pltpu.CompilerParams(
            dimension_semantics=("parallel",),   # v7x: 2 TCs split the batch axis
            vmem_limit_bytes=vmem_limit,
        ),
    )(x_pad, w_taps, shift)

    if L_out != L:
        out = out[:, :, :L]                     # drop lane-alignment padding
    return out.astype(x.dtype)                  # already (N, C, L): no transpose


def conv_block_reference(x, weight, gamma, beta, running_mean, running_var,
                         *, eps=1e-5, matmul_dtype=jnp.float32):
    """Pure-JAX reference. matmul_dtype=bfloat16 mirrors the kernel's MXU path."""
    N, C, L = x.shape
    C_out, C_in, K = weight.shape
    total_pad = K - 1
    left = total_pad // 2
    x_pad = jnp.pad(x, ((0, 0), (0, 0), (left, total_pad - left)))

    inv_std = 1.0 / jnp.sqrt(running_var + eps)
    scale = gamma * inv_std
    shift = beta - running_mean * scale
    w_scaled = weight * scale[:, None, None]                    # fold scale first

    y = jnp.zeros((N, C_out, L), jnp.float32)
    for k in range(K):
        y = y + jnp.einsum(
            "oc,ncl->nol",
            w_scaled[:, :, k].astype(matmul_dtype),
            x_pad[:, :, k:k + L].astype(matmul_dtype),
            preferred_element_type=jnp.float32,
        )
    y = y + shift[None, :, None]
    return y * jax.nn.sigmoid(y)


if __name__ == "__main__":
    # Small deterministic config: args.encoder_dim = 32, args.kernel_size = 3
    N, C, L, K = 2, 32, 16, 3

    key = jax.random.PRNGKey(0)
    kx, kw, kg, kb, km, kv = jax.random.split(key, 6)

    x = jax.random.normal(kx, (N, C, L), dtype=jnp.float32)
    weight = jax.random.normal(kw, (C, C, K), dtype=jnp.float32) * 0.1   # Conv1d (C_out, C_in, K), bias=False
    gamma = jax.random.normal(kg, (C,), dtype=jnp.float32) * 0.1 + 1.0   # BN weight
    beta = jax.random.normal(kb, (C,), dtype=jnp.float32) * 0.1          # BN bias
    running_mean = jax.random.normal(km, (C,), dtype=jnp.float32) * 0.1
    running_var = jax.nn.softplus(jax.random.normal(kv, (C,), dtype=jnp.float32)) + 0.5

    out = conv_block(x, weight, gamma, beta, running_mean, running_var)
    out = jax.block_until_ready(out)
    assert out.shape == (N, C, L)

    # Tight check vs a reference using the same bf16 MXU operands.
    ref_bf16 = conv_block_reference(x, weight, gamma, beta, running_mean,
                                    running_var, matmul_dtype=jnp.bfloat16)
    assert jnp.allclose(out, ref_bf16, atol=1e-3, rtol=1e-3), (
        f"bf16-path max abs err = {jnp.max(jnp.abs(out - ref_bf16))}"
    )

    # Sanity check vs the full-f32 reference (bf16 quantization tolerance).
    ref_f32 = conv_block_reference(x, weight, gamma, beta, running_mean,
                                   running_var, matmul_dtype=jnp.float32)
    assert jnp.allclose(out, ref_f32, atol=5e-2, rtol=5e-2), (
        f"f32-ref max abs err = {jnp.max(jnp.abs(out - ref_f32))}"
    )

    print("KERNEL_OK")
</pallas_src>

<mosaic_0001>
module attributes {stable_mosaic.version = 11 : i64} {
  func.func @convblock_kernel(%arg0: i32, %arg1: memref<1x32x130xbf16, #tpu.memory_space<vmem>>, %arg2: memref<3x32x32xbf16, #tpu.memory_space<vmem>>, %arg3: memref<32x1xf32, #tpu.memory_space<vmem>>, %arg4: memref<1x32x128xf32, #tpu.memory_space<vmem>>) attributes {dimension_semantics = [#tpu.dimension_semantics<parallel>], iteration_bounds = array<i64: 2>, scalar_prefetch = 0 : i64, scratch_operands = 0 : i64, tpu.core_type = #tpu.core_type<tc>, window_params = [{transform_indices = @transform_0, window_bounds = array<i64: 1, 32, 130>}, {pipeline_mode = #tpu.pipeline_mode<synchronous>, transform_indices = @transform_1, window_bounds = array<i64: 3, 32, 32>}, {pipeline_mode = #tpu.pipeline_mode<synchronous>, transform_indices = @transform_2, window_bounds = array<i64: 32, 1>}, {transform_indices = @transform_3, window_bounds = array<i64: 1, 32, 128>}]} {
    %cst = arith.constant 0.000000e+00 : f32
    %0 = vector.broadcast %cst : f32 to vector<32x128xf32>
    %c0 = arith.constant 0 : index
    %c0_0 = arith.constant 0 : index
    %c0_1 = arith.constant 0 : index
    %1 = vector.load %arg1[%c0, %c0_0, %c0_1] : memref<1x32x130xbf16, #tpu.memory_space<vmem>>, vector<1x32x128xbf16>
    %2 = vector.shape_cast %1 : vector<1x32x128xbf16> to vector<32x128xbf16>
    %c0_2 = arith.constant 0 : index
    %c0_3 = arith.constant 0 : index
    %c0_4 = arith.constant 0 : index
    %3 = vector.load %arg2[%c0_2, %c0_3, %c0_4] : memref<3x32x32xbf16, #tpu.memory_space<vmem>>, vector<1x32x32xbf16>
    %4 = vector.shape_cast %3 : vector<1x32x32xbf16> to vector<32x32xbf16>
    %cst_5 = arith.constant dense<0.000000e+00> : vector<32x128xf32>
    %5 = tpu.matmul %4, %2, %cst_5 {dimension_numbers = #tpu.dot_dimension_numbers<[1], [0], [0], [1], [0, 0, 1, 1], [], []>} : vector<32x32xbf16>, vector<32x128xbf16>, vector<32x128xf32> -> vector<32x128xf32>
    %6 = arith.addf %0, %5 : vector<32x128xf32>
    %c0_6 = arith.constant 0 : index
    %c0_7 = arith.constant 0 : index
    %c1 = arith.constant 1 : index
    %7 = vector.load %arg1[%c0_6, %c0_7, %c1] : memref<1x32x130xbf16, #tpu.memory_space<vmem>>, vector<1x32x128xbf16>
    %8 = vector.shape_cast %7 : vector<1x32x128xbf16> to vector<32x128xbf16>
    %c1_8 = arith.constant 1 : index
    %c0_9 = arith.constant 0 : index
    %c0_10 = arith.constant 0 : index
    %9 = vector.load %arg2[%c1_8, %c0_9, %c0_10] : memref<3x32x32xbf16, #tpu.memory_space<vmem>>, vector<1x32x32xbf16>
    %10 = vector.shape_cast %9 : vector<1x32x32xbf16> to vector<32x32xbf16>
    %cst_11 = arith.constant dense<0.000000e+00> : vector<32x128xf32>
    %11 = tpu.matmul %10, %8, %cst_11 {dimension_numbers = #tpu.dot_dimension_numbers<[1], [0], [0], [1], [0, 0, 1, 1], [], []>} : vector<32x32xbf16>, vector<32x128xbf16>, vector<32x128xf32> -> vector<32x128xf32>
    %12 = arith.addf %6, %11 : vector<32x128xf32>
    %c0_12 = arith.constant 0 : index
    %c0_13 = arith.constant 0 : index
    %c2 = arith.constant 2 : index
    %13 = vector.load %arg1[%c0_12, %c0_13, %c2] : memref<1x32x130xbf16, #tpu.memory_space<vmem>>, vector<1x32x128xbf16>
    %14 = vector.shape_cast %13 : vector<1x32x128xbf16> to vector<32x128xbf16>
    %c2_14 = arith.constant 2 : index
    %c0_15 = arith.constant 0 : index
    %c0_16 = arith.constant 0 : index
    %15 = vector.load %arg2[%c2_14, %c0_15, %c0_16] : memref<3x32x32xbf16, #tpu.memory_space<vmem>>, vector<1x32x32xbf16>
    %16 = vector.shape_cast %15 : vector<1x32x32xbf16> to vector<32x32xbf16>
    %cst_17 = arith.constant dense<0.000000e+00> : vector<32x128xf32>
    %17 = tpu.matmul %16, %14, %cst_17 {dimension_numbers = #tpu.dot_dimension_numbers<[1], [0], [0], [1], [0, 0, 1, 1], [], []>} : vector<32x32xbf16>, vector<32x128xbf16>, vector<32x128xf32> -> vector<32x128xf32>
    %18 = arith.addf %12, %17 : vector<32x128xf32>
    %c0_18 = arith.constant 0 : index
    %c0_19 = arith.constant 0 : index
    %19 = vector.load %arg3[%c0_18, %c0_19] : memref<32x1xf32, #tpu.memory_space<vmem>>, vector<32x1xf32>
    %20 = vector.broadcast %19 : vector<32x1xf32> to vector<32x128xf32>
    %21 = arith.addf %18, %20 : vector<32x128xf32>
    %22 = arith.negf %21 : vector<32x128xf32>
    %23 = math.exp %22 : vector<32x128xf32>
    %cst_20 = arith.constant 1.000000e+00 : f32
    %24 = vector.broadcast %cst_20 : f32 to vector<32x128xf32>
    %25 = arith.addf %24, %23 : vector<32x128xf32>
    %26 = arith.divf %24, %25 : vector<32x128xf32>
    %27 = arith.mulf %21, %26 : vector<32x128xf32>
    %c0_21 = arith.constant 0 : index
    %c0_22 = arith.constant 0 : index
    %c0_23 = arith.constant 0 : index
    %28 = vector.load %arg4[%c0_21, %c0_22, %c0_23] : memref<1x32x128xf32, #tpu.memory_space<vmem>>, vector<1x32x128xf32>
    %29 = vector.shape_cast %28 : vector<1x32x128xf32> to vector<32x128xf32>
    %30 = vector.shape_cast %27 : vector<32x128xf32> to vector<1x32x128xf32>
    tpu.vector_store %arg4[%c0_21, %c0_22, %c0_23], %30 {strides = array<i32>} : memref<1x32x128xf32, #tpu.memory_space<vmem>>, vector<1x32x128xf32>,
    return
  }
  func.func @transform_0(%arg0: i32) -> (i32, i32, i32) {
    %c0_i32 = arith.constant 0 : i32
    %c0_i32_0 = arith.constant 0 : i32
    %c0_i32_1 = arith.constant 0 : i32
    return %arg0, %c0_i32, %c0_i32_0 : i32, i32, i32
  }
  func.func @transform_1(%arg0: i32) -> (i32, i32, i32) {
    %c0_i32 = arith.constant 0 : i32
    %c0_i32_0 = arith.constant 0 : i32
    %c0_i32_1 = arith.constant 0 : i32
    %c0_i32_2 = arith.constant 0 : i32
    return %c0_i32, %c0_i32_0, %c0_i32_1 : i32, i32, i32
  }
  func.func @transform_2(%arg0: i32) -> (i32, i32) {
    %c0_i32 = arith.constant 0 : i32
    %c0_i32_0 = arith.constant 0 : i32
    %c0_i32_1 = arith.constant 0 : i32
    return %c0_i32, %c0_i32_0 : i32, i32
  }
  func.func @transform_3(%arg0: i32) -> (i32, i32, i32) {
    %c0_i32 = arith.constant 0 : i32
    %c0_i32_0 = arith.constant 0 : i32
    %c0_i32_1 = arith.constant 0 : i32
    return %arg0, %c0_i32, %c0_i32_0 : i32, i32, i32
  }
}

</mosaic_0001>

<llo_original>
// kernel: conv_block.1
$region0: #{conv_block.1}
  #allocation0 [shape = 'u32[]', space=smem, size = 0x4, offset = 0x4, fixed_abs, tag = 'smem constant byte address 0x4 - core index']
  #allocation1 [shape = 'u32[144,128]{1,0:T(1,128)}', space=vmem, size = 0x12000, scoped, tag = 'internal scratch']
  %s0 = inlined_call_operand.vmem [shape: bf16[2,32,130], index: 0, kind: input, shape index: {}]
  %s1 = inlined_call_operand.vmem [shape: bf16[3,32,32], index: 1, kind: input, shape index: {}]
  %s2 = inlined_call_operand.vmem [shape: f32[32,1], index: 2, kind: input, shape index: {}]
  %s3 = inlined_call_operand.vmem [shape: f32[2,32,128], index: 3, kind: output, shape index: {}]
  %s4 = sld [smem:[#allocation0]]
  $region45: #{conv_block.1} parent=0
    _
  %s6 = ssub.s32 1, %s4
  %s7 = scalar_select 0, %s6, %s4
  loop: start=0, step=1, limit=4
  $region2: #{conv_block.1} parent=0 // loop_pre_header
    _
  $region3: #{conv_block.1} parent=0 // loop_header
    %s9 = sphi 0, %s13
    %p10 = scmp.ge.s32.totalorder %s9, 4
    %s19 = sphi 0, %s21
    %s22 = sphi 0, %s19
    %s23 = sphi 0, %s22
    %s39 = sphi 0, %s23
    %s43 = sphi 0, %s43
    %s45 = sphi 0, %s43
    %s46 = sphi 0, %s45
    %s60 = sphi 0, %s46
    %s64 = sphi 0, %s64
    %s66 = sphi 0, %s64
    %s67 = sphi 0, %s66
    %s81 = sphi 0, %s67
    %s87 = sphi 0, %s89
    %s90 = sphi 0, %s87
    %s91 = sphi 0, %s90
    %s107 = sphi 0, %s91
  $region4: #{conv_block.1} parent=0 // loop_header_branch
    %12 = sbr.rel (%p10) target = $region8
  $region5: #{conv_block.1} parent=0 // loop_body
    %s14 = ssub.s32 %s9, 1
    %s15 = ssub.s32 %s9, 2
    %s16 = sadd.s32 %s9, 1
    %s17 = ssub.s32 %s9, %s16
    %p18 = scmp.eq.s32.totalorder %s17, 0
    %s20 = sadd.s32 %s19, 1
    %s21 = scalar_select %p18, %s19, %s20
    %p24 = pneg %p18
    %p25 = scmp.eq.s32.totalorder %s9, 1
    %p26 = por %p24, %p25
    %p27 = scmp.ne.s32.totalorder %s19, %s22
    %p28 = scmp.eq.s32.totalorder %s9, 0
    %p29 = por %p27, %p28
    %p30 = scmp.ne.s32.totalorder %s19, %s22
    %p31 = scmp.eq.s32.totalorder %s14, 1
    %p32 = por %p30, %p31
    %p33 = scmp.ne.s32.totalorder %s22, %s23
    %p34 = scmp.eq.s32.totalorder %s14, 0
    %p35 = por %p33, %p34
    %p36 = scmp.ne.s32.totalorder %s22, %s23
    %p37 = scmp.eq.s32.totalorder %s15, 1
    %p38 = por %p36, %p37
    %p40 = scmp.ne.s32.totalorder %s23, %s39
    %p41 = scmp.eq.s32.totalorder %s15, 0
    %p42 = por %p40, %p41
    %s44 = sadd.s32 %s43, 1
    %p47 = scmp.eq.s32.totalorder %s9, 1
    %p48 = scmp.ne.s32.totalorder %s43, %s45
    %p49 = scmp.eq.s32.totalorder %s9, 0
    %p50 = por %p48, %p49
    %p51 = scmp.ne.s32.totalorder %s43, %s45
    %p52 = scmp.eq.s32.totalorder %s14, 1
    %p53 = por %p51, %p52
    %p54 = scmp.ne.s32.totalorder %s45, %s46
    %p55 = scmp.eq.s32.totalorder %s14, 0
    %p56 = por %p54, %p55
    %p57 = scmp.ne.s32.totalorder %s45, %s46
    %p58 = scmp.eq.s32.totalorder %s15, 1
    %p59 = por %p57, %p58
    %p61 = scmp.ne.s32.totalorder %s46, %s60
    %p62 = scmp.eq.s32.totalorder %s15, 0
    %p63 = por %p61, %p62
    %s65 = sadd.s32 %s64, 1
    %p68 = scmp.eq.s32.totalorder %s9, 1
    %p69 = scmp.ne.s32.totalorder %s64, %s66
    %p70 = scmp.eq.s32.totalorder %s9, 0
    %p71 = por %p69, %p70
    %p72 = scmp.ne.s32.totalorder %s64, %s66
    %p73 = scmp.eq.s32.totalorder %s14, 1
    %p74 = por %p72, %p73
    %p75 = scmp.ne.s32.totalorder %s66, %s67
    %p76 = scmp.eq.s32.totalorder %s14, 0
    %p77 = por %p75, %p76
    %p78 = scmp.ne.s32.totalorder %s66, %s67
    %p79 = scmp.eq.s32.totalorder %s15, 1
    %p80 = por %p78, %p79
    %p82 = scmp.ne.s32.totalorder %s67, %s81
    %p83 = scmp.eq.s32.totalorder %s15, 0
    %p84 = por %p82, %p83
    %s85 = ssub.s32 %s9, %s16
    %p86 = scmp.eq.s32.totalorder %s85, 0
    %s88 = sadd.s32 %s87, 1
    %s89 = scalar_select %p86, %s87, %s88
    %p92 = pneg %p86
    %p93 = scmp.eq.s32.totalorder %s9, 1
    %p94 = por %p92, %p93
    %p95 = scmp.ne.s32.totalorder %s87, %s90
    %p96 = scmp.eq.s32.totalorder %s9, 0
    %p97 = por %p95, %p96
    %p98 = scmp.ne.s32.totalorder %s87, %s90
    %p99 = scmp.eq.s32.totalorder %s14, 1
    %p100 = por %p98, %p99
    %p101 = scmp.ne.s32.totalorder %s90, %s91
    %p102 = scmp.eq.s32.totalorder %s14, 0
    %p103 = por %p101, %p102
    %p104 = scmp.ne.s32.totalorder %s90, %s91
    %p105 = scmp.eq.s32.totalorder %s15, 1
    %p106 = por %p104, %p105
    %p108 = scmp.ne.s32.totalorder %s91, %s107
    %p109 = scmp.eq.s32.totalorder %s15, 0
    %p110 = por %p108, %p109
    %p111 = scmp.le.s32.totalorder 1, %s9
    %p112 = scmp.lt.s32.totalorder %s9, 3
    %p113 = pnand %p111, %p112
    %p114 = pneg %p113
    // Predicated region
    $region9: #{conv_block.1} parent=5 // pred_check
      _
    $region10: #{conv_block.1} parent=5 // pred_check_branch
      %116 = sbr.rel (%p113) target = $region12
    $region11: #{conv_block.1} parent=5 // pred_region
      %s117 = ssub.s32 %s9, 1
      // Predicated region
      $region13: #{conv_block.1} parent=11 // pred_check
        %p118 = pneg %p56
      $region14: #{conv_block.1} parent=11 // pred_check_branch
        %120 = sbr.rel (%p118) target = $region16
      $region15: #{conv_block.1} parent=11 // pred_region
        _
      $region16: #{conv_block.1} parent=11 // pred_fallthru
        _
      // Predicated region
      $region17: #{conv_block.1} parent=11 // pred_check
        %p121 = pneg %p77
      $region18: #{conv_block.1} parent=11 // pred_check_branch
        %123 = sbr.rel (%p121) target = $region20
      $region19: #{conv_block.1} parent=11 // pred_region
        _
      $region20: #{conv_block.1} parent=11 // pred_fallthru
        _
    $region12: #{conv_block.1} parent=5 // pred_fallthru
      _
    %p124 = scmp.lt.s32.totalorder %s9, 2
    // Predicated region
    $region21: #{conv_block.1} parent=5 // pred_check
      %p125 = pneg %p124
    $region22: #{conv_block.1} parent=5 // pred_check_branch
      %127 = sbr.rel (%p125) target = $region24
    $region23: #{conv_block.1} parent=5 // pred_region
      // Predicated region
      $region25: #{conv_block.1} parent=23 // pred_check
        %p128 = pneg %p29
      $region26: #{conv_block.1} parent=23 // pred_check_branch
        %130 = sbr.rel (%p128) target = $region28
      $region27: #{conv_block.1} parent=23 // pred_region
        %p131 = scmp.lt.s32.totalorder %s9, 1
        %s132 = scalar_select %p131, %s9, 1
        %s133 = smul.addr %s132, 8
        %s134 = smul.addr %s133, 4
        %s135 = scalar_lea.vmem %s0, %s134
      $region28: #{conv_block.1} parent=23 // pred_fallthru
        _
    $region24: #{conv_block.1} parent=5 // pred_fallthru
      _
    %p136 = scmp.le.s32.totalorder 1, %s9
    %p137 = scmp.lt.s32.totalorder %s9, 3
    %p138 = pnand %p136, %p137
    %p139 = pneg %p138
    // Predicated region
    $region29: #{conv_block.1} parent=5 // pred_check
      _
    $region30: #{conv_block.1} parent=5 // pred_check_branch
      %141 = sbr.rel (%p138) target = $region32
    $region31: #{conv_block.1} parent=5 // pred_region
      %s142 = ssub.s32 %s9, 1
      %p143 = scmp.lt.s32.totalorder %s14, 1
      %s144 = scalar_select %p143, %s14, 1
      %s145 = smul.addr %s144, 8
      %s146 = smul.addr %s145, 4
      %s147 = scalar_lea.vmem %s0, %s146
      %p148 = pneg %p35
      %p149 = pneg %p32
      %p150 = pneg %p56
      %p151 = pneg %p53
      %p152 = pneg %p77
      %p153 = pneg %p74
      %p154 = pneg %p103
      %p155 = pneg %p100
      %p156 = scmp.lt.s32.totalorder %s14, 1
      %s157 = scalar_select %p156, %s14, 1
      %s158 = smul.addr %s157, 4
      %s159 = smul.addr %s158, 8
      %s160 = scalar_lea.vmem %s3, %s159
      %p161 = scmp.lt.s32.totalorder %s14, 1
      %s162 = scalar_select %p161, %s14, 1
      %s163 = smul.addr %s162, 8
      %s164 = smul.addr %s163, 4
      %s165 = scalar_lea.vmem %s0, %s164
      %p166 = scmp.lt.s32.totalorder %s14, 1
      %s167 = scalar_select %p166, %s14, 1
      %s168 = smul.addr %s167, 4
      %s169 = smul.addr %s168, 8
      %s170 = scalar_lea.vmem %s3, %s169
      %v172 = vld [vmem:[%s165] sm:$0xf]
      %v173 = vld [vmem:[%s165 + $0x8] sm:$0xf]
      %v174 = vld [vmem:[%s165 + $0x10] sm:$0xf]
      %v175 = vld [vmem:[%s165 + $0x18] sm:$0xf]
      %v176 = vld [vmem:[%s1] sm:$0xf]
      %v177 = vld [vmem:[%s1 + $0x4] sm:$0xf]
      %v178 = vld [vmem:[%s1 + $0x8] sm:$0xf]
      %v179 = vld [vmem:[%s1 + $0xc] sm:$0xf]
      %v180 = vld [vmem:[%s165] sm:$0xff]
      %v181 = vld [vmem:[%s165 + $0x8] sm:$0xff]
      %v182 = vld [vmem:[%s165 + $0x10] sm:$0xff]
      %v183 = vld [vmem:[%s165 + $0x18] sm:$0xff]
      %s184 = scalar_lea.vmem %s1, 16
      %v185 = vld [vmem:[%s184] sm:$0xf]
      %v186 = vld [vmem:[%s184 + $0x4] sm:$0xf]
      %v187 = vld [vmem:[%s184 + $0x8] sm:$0xf]
      %v188 = vld [vmem:[%s184 + $0xc] sm:$0xf]
      %v193 = vunpack.c.l.b16 %v185
      %v194 = vunpack.c.l.b16 %v186
      %v195 = vunpack.c.l.b16 %v187
      %v196 = vunpack.c.l.b16 %v188
      %v197 = vpack.c.b16 %v194, %v193
      %v198 = vpack.c.b16 %v196, %v195
      %v203 = vunpack.c.l.b16 %v180
      %v204 = vunpack.c.h.b16 %v180
      %v205 = vunpack.c.l.b16 %v181
      %v206 = vunpack.c.h.b16 %v181
      %v207 = vunpack.c.l.b16 %v182
      %v208 = vunpack.c.h.b16 %v182
      %v209 = vunpack.c.l.b16 %v183
      %v210 = vunpack.c.h.b16 %v183
      %v211 = vpack.c.b16 %v205, %v203
      %v212 = vpack.c.b16 %v206, %v204
      %v213 = vpack.c.b16 %v209, %v207
      %v214 = vpack.c.b16 %v210, %v208
      %215 = vrot.lane.b32.xlu0 %v211, 127
      %v216 = vpop.permute.xlu0 %215
      %217 = vrot.lane.b32.xlu0 %v212, 127
      %v218 = vpop.permute.xlu0 %217
      %219 = vrot.lane.b32.xlu0 %v213, 127
      %v220 = vpop.permute.xlu0 %219
      %221 = vrot.lane.b32.xlu0 %v214, 127
      %v222 = vpop.permute.xlu0 %221
      %vm223 = vcmask 1039360
      %v224 = vsel %vm223, %v216, %v218
      %v225 = vsel %vm223, %v220, %v222
      %vm228 = vcmask 261120
      %v230 = vsel %vm228, %v197, 0
      %v233 = vsel %vm228, %v198, 0
      %235 = vmatprep.subr.bf16.mxu0 0
      %236 = vmatpush1.bf16.msra.mxu0 %v224
      %237 = vmatprep.subr.bf16.mxu0 0
      %238 = vmatpush1.bf16.msra.mxu0 %v225
      %239 = vmatprep.subr.bf16.mxu0 0
      %240 = vmatpush1.bf16.msra.mxu0 0
      %241 = vmatprep.subr.bf16.mxu0 0
      %242 = vmatpush1.bf16.msra.mxu0 0
      %243 = vmatprep.subr.bf16.mxu0 0
      %244 = vmatpush1.bf16.msra.mxu0 0
      %245 = vmatprep.subr.bf16.mxu0 0
      %246 = vmatpush1.bf16.msra.mxu0 0
      %247 = vmatprep.subr.bf16.mxu0 0
      %248 = vmatpush1.bf16.msra.mxu0 0
      %249 = vmatprep.subr.bf16.mxu0 0
      %250 = vmatpush1.bf16.msra.mxu0 0
      %251 = vmatprep.subr.bf16.mxu0 0
      %252 = vmatpush1.bf16.msra.mxu0 0
      %253 = vmatprep.subr.bf16.mxu0 0
      %254 = vmatpush1.bf16.msra.mxu0 0
      %255 = vmatprep.subr.bf16.mxu0 0
      %256 = vmatpush1.bf16.msra.mxu0 0
      %257 = vmatprep.subr.bf16.mxu0 0
      %258 = vmatpush1.bf16.msra.mxu0 0
      %259 = vmatprep.subr.bf16.mxu0 0
      %260 = vmatpush1.bf16.msra.mxu0 0
      %261 = vmatprep.subr.bf16.mxu0 0
      %262 = vmatpush1.bf16.msra.mxu0 0
      %263 = vmatprep.subr.bf16.mxu0 0
      %264 = vmatpush1.bf16.msra.mxu0 0
      %265 = vmatprep.subr.bf16.mxu0 0
      %266 = vmatpush1.bf16.msra.mxu0 0
      %267 = vmatprep.mubr.bf16.mxu0 0
      %268 = vmatmul.mubr.bf16.gmra.mrb[0].mxu0 %v230
      %v269 = vpop.f32.mrb[0].mxu0
      %v270 = vadd.f32 0.0, %v269
      %v271 = vpop.f32.mrb[0].mxu0
      %v272 = vpop.f32.mrb[0].mxu0
      %v273 = vadd.f32 0.0, %v272
      %v274 = vpop.f32.mrb[0].mxu0
      %275 = vmatprep.mubr.bf16.mxu0 0
      %276 = vmatmul.mubr.bf16.gmra.mrb[0].mxu0 %v233
      %v277 = vpop.f32.mrb[0].mxu0
      %v278 = vadd.f32 0.0, %v277
      %v279 = vpop.f32.mrb[0].mxu0
      %v280 = vpop.f32.mrb[0].mxu0
      %v281 = vadd.f32 0.0, %v280
      %v282 = vpop.f32.mrb[0].mxu0
      %283 = vdwg.mxu0
      %v288 = vunpack.c.l.b16 %v176
      %v289 = vunpack.c.l.b16 %v177
      %v290 = vunpack.c.l.b16 %v178
      %v291 = vunpack.c.l.b16 %v179
      %v292 = vpack.c.b16 %v289, %v288
      %v293 = vpack.c.b16 %v291, %v290
      %v298 = vunpack.c.l.b16 %v172
      %v299 = vunpack.c.l.b16 %v173
      %v300 = vunpack.c.l.b16 %v174
      %v301 = vunpack.c.l.b16 %v175
      %v302 = vpack.c.b16 %v299, %v298
      %v303 = vpack.c.b16 %v301, %v300
      %v307 = vsel %vm228, %v292, 0
      %v310 = vsel %vm228, %v293, 0
      %312 = vmatprep.subr.bf16.mxu0 0
      %313 = vmatpush1.bf16.msra.mxu0 %v302
      %314 = vmatprep.subr.bf16.mxu0 0
      %315 = vmatpush1.bf16.msra.mxu0 %v303
      %316 = vmatprep.subr.bf16.mxu0 0
      %317 = vmatpush1.bf16.msra.mxu0 0
      %318 = vmatprep.subr.bf16.mxu0 0
      %319 = vmatpush1.bf16.msra.mxu0 0
      %320 = vmatprep.subr.bf16.mxu0 0
      %321 = vmatpush1.bf16.msra.mxu0 0
      %322 = vmatprep.subr.bf16.mxu0 0
      %323 = vmatpush1.bf16.msra.mxu0 0
      %324 = vmatprep.subr.bf16.mxu0 0
      %325 = vmatpush1.bf16.msra.mxu0 0
      %326 = vmatprep.subr.bf16.mxu0 0
      %327 = vmatpush1.bf16.msra.mxu0 0
      %328 = vmatprep.subr.bf16.mxu0 0
      %329 = vmatpush1.bf16.msra.mxu0 0
      %330 = vmatprep.subr.bf16.mxu0 0
      %331 = vmatpush1.bf16.msra.mxu0 0
      %332 = vmatprep.subr.bf16.mxu0 0
      %333 = vmatpush1.bf16.msra.mxu0 0
      %334 = vmatprep.subr.bf16.mxu0 0
      %335 = vmatpush1.bf16.msra.mxu0 0
      %336 = vmatprep.subr.bf16.mxu0 0
      %337 = vmatpush1.bf16.msra.mxu0 0
      %338 = vmatprep.subr.bf16.mxu0 0
      %339 = vmatpush1.bf16.msra.mxu0 0
      %340 = vmatprep.subr.bf16.mxu0 0
      %341 = vmatpush1.bf16.msra.mxu0 0
      %342 = vmatprep.subr.bf16.mxu0 0
      %343 = vmatpush1.bf16.msra.mxu0 0
      %344 = vmatprep.mubr.bf16.mxu0 0
      %345 = vmatmul.mubr.bf16.gmra.mrb[0].mxu0 %v307
      %v346 = vpop.f32.mrb[0].mxu0
      %v347 = vadd.f32 %v270, %v346
      %v348 = vpop.f32.mrb[0].mxu0
      %v349 = vpop.f32.mrb[0].mxu0
      %v350 = vadd.f32 %v273, %v349
      %v351 = vpop.f32.mrb[0].mxu0
      %352 = vmatprep.mubr.bf16.mxu0 0
      %353 = vmatmul.mubr.bf16.gmra.mrb[0].mxu0 %v310
      %v354 = vpop.f32.mrb[0].mxu0
      %v355 = vadd.f32 %v278, %v354
      %v356 = vpop.f32.mrb[0].mxu0
      %v357 = vpop.f32.mrb[0].mxu0
      %v358 = vadd.f32 %v281, %v357
      %v359 = vpop.f32.mrb[0].mxu0
      %360 = vdwg.mxu0
      %s361 = scalar_lea.vmem %s1, 32
      %v362 = vld [vmem:[%s361] sm:$0xf]
      %v363 = vld [vmem:[%s361 + $0x4] sm:$0xf]
      %v364 = vld [vmem:[%s361 + $0x8] sm:$0xf]
      %v365 = vld [vmem:[%s361 + $0xc] sm:$0xf]
      %v370 = vunpack.c.l.b16 %v362
      %v371 = vunpack.c.l.b16 %v363
      %v372 = vunpack.c.l.b16 %v364
      %v373 = vunpack.c.l.b16 %v365
      %v374 = vpack.c.b16 %v371, %v370
      %v375 = vpack.c.b16 %v373, %v372
      %376 = vrot.lane.b32.xlu0 %v211, 126
      %v377 = vpop.permute.xlu0 %376
      %378 = vrot.lane.b32.xlu0 %v212, 126
      %v379 = vpop.permute.xlu0 %378
      %380 = vrot.lane.b32.xlu0 %v213, 126
      %v381 = vpop.permute.xlu0 %380
      %382 = vrot.lane.b32.xlu0 %v214, 126
      %v383 = vpop.permute.xlu0 %382
      %vm384 = vcmask 1031168
      %v385 = vsel %vm384, %v377, %v379
      %v386 = vsel %vm384, %v381, %v383
      %v390 = vsel %vm228, %v374, 0
      %v393 = vsel %vm228, %v375, 0
      %395 = vmatprep.subr.bf16.mxu0 0
      %396 = vmatpush1.bf16.msra.mxu0 %v385
      %397 = vmatprep.subr.bf16.mxu0 0
      %398 = vmatpush1.bf16.msra.mxu0 %v386
      %399 = vmatprep.subr.bf16.mxu0 0
      %400 = vmatpush1.bf16.msra.mxu0 0
      %401 = vmatprep.subr.bf16.mxu0 0
      %402 = vmatpush1.bf16.msra.mxu0 0
      %403 = vmatprep.subr.bf16.mxu0 0
      %404 = vmatpush1.bf16.msra.mxu0 0
      %405 = vmatprep.subr.bf16.mxu0 0
      %406 = vmatpush1.bf16.msra.mxu0 0
      %407 = vmatprep.subr.bf16.mxu0 0
      %408 = vmatpush1.bf16.msra.mxu0 0
      %409 = vmatprep.subr.bf16.mxu0 0
      %410 = vmatpush1.bf16.msra.mxu0 0
      %411 = vmatprep.subr.bf16.mxu0 0
      %412 = vmatpush1.bf16.msra.mxu0 0
      %413 = vmatprep.subr.bf16.mxu0 0
      %414 = vmatpush1.bf16.msra.mxu0 0
      %415 = vmatprep.subr.bf16.mxu0 0
      %416 = vmatpush1.bf16.msra.mxu0 0
      %417 = vmatprep.subr.bf16.mxu0 0
      %418 = vmatpush1.bf16.msra.mxu0 0
      %419 = vmatprep.subr.bf16.mxu0 0
      %420 = vmatpush1.bf16.msra.mxu0 0
      %421 = vmatprep.subr.bf16.mxu0 0
      %422 = vmatpush1.bf16.msra.mxu0 0
      %423 = vmatprep.subr.bf16.mxu0 0
      %424 = vmatpush1.bf16.msra.mxu0 0
      %425 = vmatprep.subr.bf16.mxu0 0
      %426 = vmatpush1.bf16.msra.mxu0 0
      %427 = vmatprep.mubr.bf16.mxu0 0
      %428 = vmatmul.mubr.bf16.gmra.mrb[0].mxu0 %v390
      %v429 = vpop.f32.mrb[0].mxu0
      %v430 = vadd.f32 0.0, %v429
      %v431 = vpop.f32.mrb[0].mxu0
      %v432 = vpop.f32.mrb[0].mxu0
      %v433 = vadd.f32 0.0, %v432
      %v434 = vpop.f32.mrb[0].mxu0
      %435 = vmatprep.mubr.bf16.mxu0 0
      %436 = vmatmul.mubr.bf16.gmra.mrb[0].mxu0 %v393
      %v437 = vpop.f32.mrb[0].mxu0
      %v438 = vadd.f32 0.0, %v437
      %v439 = vpop.f32.mrb[0].mxu0
      %v440 = vpop.f32.mrb[0].mxu0
      %v441 = vadd.f32 0.0, %v440
      %v442 = vpop.f32.mrb[0].mxu0
      %443 = vdwg.mxu0
      %v444 = vadd.f32 %v347, %v430
      %v445 = vadd.f32 %v350, %v433
      %v446 = vadd.f32 %v355, %v438
      %v447 = vadd.f32 %v358, %v441
      %v448 = vld [vmem:[%s2] sm:$0xff]
      %v449 = vld [vmem:[%s2 + $0x8] sm:$0xff]
      %v450 = vld [vmem:[%s2 + $0x10] sm:$0xff]
      %v451 = vld [vmem:[%s2 + $0x18] sm:$0xff]
      %453 = vset.pattern.permute.xlu0 0
      %454 = vperm.xlu0 %453, %v448
      %v455 = vpop.permute.xlu0 %454
      %458 = vset.pattern.permute.xlu0 0
      %459 = vperm.xlu0 %458, %v449
      %v460 = vpop.permute.xlu0 %459
      %463 = vset.pattern.permute.xlu0 0
      %464 = vperm.xlu0 %463, %v450
      %v465 = vpop.permute.xlu0 %464
      %468 = vset.pattern.permute.xlu0 0
      %469 = vperm.xlu0 %468, %v451
      %v470 = vpop.permute.xlu0 %469
      %v472 = vadd.f32 %v444, %v455
      %v473 = vadd.f32 %v445, %v460
      %v474 = vadd.f32 %v446, %v465
      %v475 = vadd.f32 %v447, %v470
      %v476 = vxor.u32 %v472, 2147483648
      %v477 = vxor.u32 %v473, 2147483648
      %v478 = vxor.u32 %v474, 2147483648
      %v479 = vxor.u32 %v475, 2147483648
      %v480 = vmul.f32 %v476, 1.442695
      %v481 = vpow.pop %v480
      %v482 = vmul.f32 %v477, 1.442695
      %v483 = vpow.pop %v482
      %v484 = vmul.f32 %v478, 1.442695
      %v485 = vpow.pop %v484
      %v486 = vmul.f32 %v479, 1.442695
      %v487 = vpow.pop %v486
      %v488 = vadd.f32 %v481, 1.0
      %v489 = vadd.f32 %v483, 1.0
      %v490 = vadd.f32 %v485, 1.0
      %v491 = vadd.f32 %v487, 1.0
      %v492 = vrcp.pop %v488
      %v493 = vmul.f32 1.0, %v492
      %v494 = vrcp.pop %v489
      %v495 = vmul.f32 1.0, %v494
      %v496 = vrcp.pop %v490
      %v497 = vmul.f32 1.0, %v496
      %v498 = vrcp.pop %v491
      %v499 = vmul.f32 1.0, %v498
      %v500 = vmul.f32 %v472, %v493
      %v501 = vmul.f32 %v473, %v495
      %v502 = vmul.f32 %v474, %v497
      %v503 = vmul.f32 %v475, %v499
      %504 = vst [vmem:[%s170] sm:$0xff] %v500
      %505 = vst [vmem:[%s170 + $0x8] sm:$0xff] %v501
      %506 = vst [vmem:[%s170 + $0x10] sm:$0xff] %v502
      %507 = vst [vmem:[%s170 + $0x18] sm:$0xff] %v503
      %p508 = scmp.lt.s32.totalorder %s14, 1
      %s509 = scalar_select %p508, %s14, 1
      %s510 = smul.addr %s509, 4
      %s511 = smul.addr %s510, 8
      %s512 = scalar_lea.vmem %s3, %s511
      // Predicated region
      $region33: #{conv_block.1} parent=31 // pred_check
        %p513 = pneg %p100
      $region34: #{conv_block.1} parent=31 // pred_check_branch
        %515 = sbr.rel (%p513) target = $region36
      $region35: #{conv_block.1} parent=31 // pred_region
        _
      $region36: #{conv_block.1} parent=31 // pred_fallthru
        _
    $region32: #{conv_block.1} parent=5 // pred_fallthru
      _
    %p516 = scmp.le.s32.totalorder 2, %s9
    // Predicated region
    $region37: #{conv_block.1} parent=5 // pred_check
      %p517 = pneg %p516
    $region38: #{conv_block.1} parent=5 // pred_check_branch
      %519 = sbr.rel (%p517) target = $region40
    $region39: #{conv_block.1} parent=5 // pred_region
      %s520 = ssub.s32 %s9, 2
      // Predicated region
      $region41: #{conv_block.1} parent=39 // pred_check
        %p521 = pneg %p106
      $region42: #{conv_block.1} parent=39 // pred_check_branch
        %523 = sbr.rel (%p521) target = $region44
      $region43: #{conv_block.1} parent=39 // pred_region
        %p524 = scmp.lt.s32.totalorder %s15, 1
        %s525 = scalar_select %p524, %s15, 1
        %s526 = smul.addr %s525, 4
        %s527 = smul.addr %s526, 8
        %s528 = scalar_lea.vmem %s3, %s527
      $region44: #{conv_block.1} parent=39 // pred_fallthru
        _
    $region40: #{conv_block.1} parent=5 // pred_fallthru
      _
  $region6: #{conv_block.1} parent=0 // loop_footer
    %s13 = sadd.s32 1, %s9
  $region7: #{conv_block.1} parent=0 // loop_footer_branch
    %8 = sbr.rel target = $region3
  $region8: #{conv_block.1} parent=0 // loop_exit
    _

</llo_original>
